<compile_context>
chip_gen: v7x
topology: tpu7x:2x2x1
jax: 0.10.0
libtpu: 0.0.40
codegen_flags: <defaults>
</compile_context>

<pallas_src>
import functools

import jax
import jax.numpy as jnp
from jax.experimental import pallas as pl
from jax.experimental.pallas import tpu as pltpu

_LANES = 128
_TARGET_BLOCK_BYTES = 2 * 1024 * 1024  # ~2 MiB per block


def _scaled_sigmoid_kernel(x_ref, o_ref, *, scale, offset):
    # Compute in f32 regardless of storage dtype; exp() runs on the EUP so it
    # is hidden behind the HBM<->VMEM DMA for this memory-bound op.
    xf = x_ref[...].astype(jnp.float32)
    y = jax.nn.sigmoid(xf) * scale + offset
    o_ref[...] = y.astype(o_ref.dtype)


def scaled_sigmoid(x, min_val: float = 0.0, max_val: float = 1.0):
    """Elementwise sigmoid(x) * (max_val - min_val) + min_val."""
    assert max_val > min_val
    orig_shape = x.shape
    orig_dtype = x.dtype
    n = x.size
    if n == 0:
        return x

    itemsize = jnp.dtype(orig_dtype).itemsize
    x_flat = jnp.ravel(x)

    # Make the flat length a multiple of the lane width.  In the common case
    # (n % 128 == 0) this is a zero-copy reshape; only ragged sizes pad.
    pad = (-n) % _LANES
    if pad:
        x_flat = jnp.pad(x_flat, (0, pad))
    rows = x_flat.size // _LANES
    x2d = x_flat.reshape(rows, _LANES)

    # Large row tile (~2 MiB block), multiple of 8 sublanes.  Double-buffered
    # in + out stays well under the default scoped-VMEM limit on all chips.
    rows_per_block = max(8, (_TARGET_BLOCK_BYTES // (_LANES * itemsize)) // 8 * 8)
    if rows <= rows_per_block:
        tile_r = rows  # single block equal to full array dims (always legal)
    else:
        tile_r = rows_per_block
    grid = (pl.cdiv(rows, tile_r),)

    kernel = functools.partial(
        _scaled_sigmoid_kernel,
        scale=float(max_val) - float(min_val),
        offset=float(min_val),
    )

    cost = pl.CostEstimate(
        flops=3 * n,
        transcendentals=n,
        bytes_accessed=2 * n * itemsize,
    )

    out2d = pl.pallas_call(
        kernel,
        out_shape=jax.ShapeDtypeStruct((rows, _LANES), orig_dtype),
        grid_spec=pltpu.PrefetchScalarGridSpec(
            num_scalar_prefetch=0,
            grid=grid,
            in_specs=[pl.BlockSpec((tile_r, _LANES), lambda i: (i, 0))],
            out_specs=pl.BlockSpec((tile_r, _LANES), lambda i: (i, 0)),
        ),
        compiler_params=pltpu.CompilerParams(
            dimension_semantics=("parallel",)),
        cost_estimate=cost,
    )(x2d)

    out_flat = out2d.reshape(-1)
    if pad:
        out_flat = out_flat[:n]
    return out_flat.reshape(orig_shape)


if __name__ == "__main__":
    key = jax.random.PRNGKey(0)
    # Module accepts any shape (*); use a small NCHW-like tensor.
    x = jax.random.normal(key, (2, 4, 16, 16), dtype=jnp.float32)

    min_val, max_val = -2.0, 2.0
    out = scaled_sigmoid(x, min_val, max_val)
    out = jax.block_until_ready(out)

    # Reference check in plain JAX.
    ref = jax.nn.sigmoid(x) * (max_val - min_val) + min_val
    assert out.shape == x.shape and out.dtype == x.dtype
    assert jnp.max(jnp.abs(out - ref)) < 1e-5

    print("KERNEL_OK")
</pallas_src>

<mosaic_0001>
module attributes {stable_mosaic.version = 11 : i64} {
  func.func @_scaled_sigmoid_kernel(%arg0: i32, %arg1: memref<16x128xf32, #tpu.memory_space<vmem>>, %arg2: memref<16x128xf32, #tpu.memory_space<vmem>>) attributes {dimension_semantics = [#tpu.dimension_semantics<parallel>], iteration_bounds = array<i64: 1>, scalar_prefetch = 0 : i64, scratch_operands = 0 : i64, tpu.core_type = #tpu.core_type<tc>, window_params = [{transform_indices = @transform_0, window_bounds = array<i64: 16, 128>}, {transform_indices = @transform_1, window_bounds = array<i64: 16, 128>}]} {
    %c0 = arith.constant 0 : index
    %c0_0 = arith.constant 0 : index
    %0 = vector.load %arg1[%c0, %c0_0] : memref<16x128xf32, #tpu.memory_space<vmem>>, vector<16x128xf32>
    %1 = arith.negf %0 : vector<16x128xf32>
    %2 = math.exp %1 : vector<16x128xf32>
    %cst = arith.constant 1.000000e+00 : f32
    %3 = vector.broadcast %cst : f32 to vector<16x128xf32>
    %4 = arith.addf %3, %2 : vector<16x128xf32>
    %5 = arith.divf %3, %4 : vector<16x128xf32>
    %cst_1 = arith.constant 4.000000e+00 : f32
    %6 = vector.broadcast %cst_1 : f32 to vector<16x128xf32>
    %7 = arith.mulf %5, %6 : vector<16x128xf32>
    %cst_2 = arith.constant -2.000000e+00 : f32
    %8 = vector.broadcast %cst_2 : f32 to vector<16x128xf32>
    %9 = arith.addf %7, %8 : vector<16x128xf32>
    %c0_3 = arith.constant 0 : index
    %c0_4 = arith.constant 0 : index
    %10 = vector.load %arg2[%c0_3, %c0_4] : memref<16x128xf32, #tpu.memory_space<vmem>>, vector<16x128xf32>
    tpu.vector_store %arg2[%c0_3, %c0_4], %9 {strides = array<i32>} : memref<16x128xf32, #tpu.memory_space<vmem>>, vector<16x128xf32>,
    return
  }
  func.func @transform_0(%arg0: i32) -> (i32, i32) {
    %c0_i32 = arith.constant 0 : i32
    %c0_i32_0 = arith.constant 0 : i32
    return %arg0, %c0_i32 : i32, i32
  }
  func.func @transform_1(%arg0: i32) -> (i32, i32) {
    %c0_i32 = arith.constant 0 : i32
    %c0_i32_0 = arith.constant 0 : i32
    return %arg0, %c0_i32 : i32, i32
  }
}

</mosaic_0001>

<llo_original>
// kernel: tpu_custom_call.1
$region0: #{tpu_custom_call.1}
  #allocation0 [shape = 'u32[]', space=smem, size = 0x4, offset = 0x4, fixed_abs, tag = 'smem constant byte address 0x4 - core index']
  #allocation1 [shape = 'u32[144,128]{1,0:T(1,128)}', space=vmem, size = 0x12000, scoped, tag = 'internal scratch']
  %s0 = inlined_call_operand.hbm [shape: f32[16,128], index: 0, kind: input, shape index: {}]
  %s1 = inlined_call_operand.hbm [shape: f32[16,128], index: 1, kind: output, shape index: {}]
  %s2 = sld [smem:[#allocation0]]
  $region18: #{tpu_custom_call.1} parent=0
    _
  %s4 = ssub.s32 1, %s2
  %s5 = scalar_select 0, %s4, %s2
  $region1: #{tpu_custom_call.1} parent=0
    #allocation2 [shape = 'u8[8192]{0}', space=vmem, size = 0x2000, scoped, tag = 'input window, operand 0, single buffered']
    #allocation3 [shape = 's32[1]{0}', space=sflag, size = 0x4, scoped, tag = 'scoped memory for tpu_custom_call.1']
    #allocation4 [shape = 's32[1]{0}', space=sflag, size = 0x4, scoped, tag = 'scoped memory for tpu_custom_call.1']
    #allocation5 [shape = 'u8[8192]{0}', space=vmem, size = 0x2000, scoped, tag = 'output window, operand 0, single buffered']
    %6 = vsyncpa [#allocation3], 0
    %7 = vsyncpa [#allocation4], 0
    // Predicated region
    $region2: #{tpu_custom_call.1} parent=1 // pred_check
      _
    $region3: #{tpu_custom_call.1} parent=1 // pred_check_branch
      %9 = sbr.rel (0) target = $region5
    $region4: #{tpu_custom_call.1} parent=1 // pred_region
      %s11 = ssub.s32 256, 256
      %12 = vsyncadd [#allocation3], %s11
      %s13 = sshll.u32 [#allocation2], 4
      %s14 = int_to_ptr.vmem [resolvable:$true] %s13
      %19 = dma.hbm_to_vmem [thread:$0]  %s0, 256, %s14, [#allocation3], 128, 128, 8
    $region5: #{tpu_custom_call.1} parent=1 // pred_fallthru
      _
    // Predicated region
    $region6: #{tpu_custom_call.1} parent=1 // pred_check
      _
    $region7: #{tpu_custom_call.1} parent=1 // pred_check_branch
      %21 = sbr.rel (0) target = $region9
    $region8: #{tpu_custom_call.1} parent=1 // pred_region
      %22 = dma.done [#allocation3], 256
    $region9: #{tpu_custom_call.1} parent=1 // pred_fallthru
      _
    %v23 = vld [vmem:[#allocation2] sm:$0xff]
    %v24 = vld [vmem:[#allocation2 + $0x8] sm:$0xff]
    %v25 = vxor.u32 %v23, 2147483648
    %v26 = vxor.u32 %v24, 2147483648
    %v27 = vmul.f32 %v25, 1.442695
    %v28 = vpow.pop %v27
    %v29 = vmul.f32 %v26, 1.442695
    %v30 = vpow.pop %v29
    %v31 = vadd.f32 %v28, 1.0
    %v32 = vadd.f32 %v30, 1.0
    %v33 = vrcp.pop %v31
    %v34 = vmul.f32 1.0, %v33
    %v35 = vrcp.pop %v32
    %v36 = vmul.f32 1.0, %v35
    %v37 = vmul.f32 %v34, 4.0
    %v38 = vmul.f32 %v36, 4.0
    %v39 = vadd.f32 %v37, -2.0
    %v40 = vadd.f32 %v38, -2.0
    %41 = vst [vmem:[#allocation5] sm:$0xff] %v39
    %42 = vst [vmem:[#allocation5 + $0x8] sm:$0xff] %v40
    // Predicated region
    $region10: #{tpu_custom_call.1} parent=1 // pred_check
      _
    $region11: #{tpu_custom_call.1} parent=1 // pred_check_branch
      %44 = sbr.rel (0) target = $region13
    $region12: #{tpu_custom_call.1} parent=1 // pred_region
      %s46 = ssub.s32 256, 256
      %47 = vsyncadd [#allocation4], %s46
      %s48 = sshll.u32 [#allocation5], 4
      %s49 = int_to_ptr.vmem [resolvable:$true] %s48
      %54 = dma.vmem_to_hbm [thread:$0]  %s49, 256, %s1, [#allocation4], 128, 128, 8
    $region13: #{tpu_custom_call.1} parent=1 // pred_fallthru
      _
    // Predicated region
    $region14: #{tpu_custom_call.1} parent=1 // pred_check
      _
    $region15: #{tpu_custom_call.1} parent=1 // pred_check_branch
      %56 = sbr.rel (0) target = $region17
    $region16: #{tpu_custom_call.1} parent=1 // pred_region
      %57 = dma.done [#allocation4], 256
    $region17: #{tpu_custom_call.1} parent=1 // pred_fallthru
      _
    %58 = vsyncpa [#allocation3], 1
    %59 = vsyncpa [#allocation4], 1

</llo_original>
